<compile_context>
chip_gen: v5e
topology: v5e:2x2
jax: 0.10.0
libtpu: 0.0.40
codegen_flags: <defaults>
</compile_context>

<pallas_src>
import functools

import jax
import jax.numpy as jnp
from jax.experimental import pallas as pl
from jax.experimental.pallas import tpu as pltpu

_MIB = 1024 * 1024


def _layernorm_kernel(x_ref, alpha_ref, beta_ref, o_ref, *, eps, inv_nm1):
    # x_ref: (TM, H) tile of rows; alpha_ref / beta_ref: (1, H).
    x = x_ref[...].astype(jnp.float32)

    # Two-pass mean/variance: numerically safer than the one-pass sum/sumsq
    # form, and this kernel is HBM-bound anyway (compute hides behind DMAs).
    mu = jnp.mean(x, axis=-1, keepdims=True)
    diff = x - mu
    # torch.std default is unbiased -> divide by (H - 1); done as a multiply
    # by a precomputed constant instead of an in-kernel divide.
    var = jnp.sum(diff * diff, axis=-1, keepdims=True) * jnp.float32(inv_nm1)
    sigma = jnp.sqrt(var)

    # Per-row reciprocal (shape (TM, 1)) instead of a full (TM, H) divide.
    # approx=False keeps full f32 accuracy; at (TM, 1) the cost is negligible.
    inv = pl.reciprocal(sigma + jnp.float32(eps), approx=False)

    alpha = alpha_ref[...].astype(jnp.float32)
    beta = beta_ref[...].astype(jnp.float32)

    o_ref[...] = ((diff * inv) * alpha + beta).astype(o_ref.dtype)


def _vmem_limit_bytes():
    """Scoped-VMEM limit, per TensorCore.

    Conservative: assume v7x's 64 MiB/TC (-> 48 MiB limit) unless the chip is
    positively identified as v5e/v6e (128 MiB/TC -> 96 MiB limit). This avoids
    over-subscribing VMEM if a capacity query returns chip-level numbers on a
    2-TensorCore chip.
    """
    limit = 48 * _MIB
    try:
        info = pltpu.get_tpu_info()
        txt = (str(info) + " " + str(getattr(info, "chip_version", ""))).lower()
        if "v5" in txt or "v6" in txt:
            limit = 96 * _MIB
    except Exception:
        pass  # keep the conservative v7x-safe limit
    return int(limit)


def _sublane(itemsize):
    # Packed-sublane multiple per dtype width: f32 -> 8, bf16 -> 16, int8 -> 32.
    return {1: 32, 2: 16, 4: 8}.get(int(itemsize), 8)


def _choose_row_tile(rows, h, itemsize, vmem_limit):
    """Row tile sized from a per-step DMA bytes target and the VMEM ceiling."""
    sub = _sublane(itemsize)

    # Live VMEM per tile row: 2x double-buffered input + 2x double-buffered
    # output blocks plus ~3 (tm, H) f32 temporaries (x_f32, diff, pre-cast
    # result) for the in-kernel compute. 0.8 safety factor + 2 MiB headroom
    # for Mosaic's internal scratch.
    per_row = h * (2 * itemsize + 2 * itemsize + 3 * 4)
    vmem_budget = max(int(vmem_limit * 0.8) - 2 * _MIB, per_row * sub)
    tm_vmem = vmem_budget // max(per_row, 1)

    # ~4 MiB of input per grid step: large enough that the ~0.35 us per-step
    # overhead is negligible at v7x/v6e HBM rates, small enough to fit the
    # v7x 48 MiB/TC budget comfortably (v5e's slower HBM needs even less).
    tm_dma = (4 * _MIB) // max(h * itemsize, 1)

    tm = max(sub, min(tm_vmem, tm_dma, max(rows, sub)))

    # Keep >= 4 grid steps when there is enough work: gives the software
    # pipeline load/compute/store overlap on every generation and both v7x
    # TensorCores a share of this "parallel" axis. (No generation-specific
    # halving: on v5e/v6e there is no second TC to feed.)
    if rows >= 4 * sub:
        tm = min(tm, pl.cdiv(rows, 4))
    tm = max(sub, (tm // sub) * sub)

    # Prefer an even step count so a v7x megacore splits the "parallel" axis
    # evenly across its two TensorCores (harmless on v5e/v6e).
    nsteps = pl.cdiv(rows, tm)
    if nsteps > 1 and nsteps % 2 == 1:
        tm_even = ((pl.cdiv(rows, nsteps + 1) + sub - 1) // sub) * sub
        if tm_even >= sub:
            tm = tm_even
    return int(tm)


def layernorm(x, alpha, beta, eps=1e-4, row_tile=None):
    """x: (B, L, H); alpha, beta broadcastable to (1, 1, H). Returns (B, L, H)."""
    b, l, h = x.shape
    assert h > 1, "hidden_size must be > 1 (unbiased std divides by H-1)"
    rows = b * l
    x2 = x.reshape(rows, h)                       # free contiguous reshape
    alpha2 = jnp.asarray(alpha).reshape(1, h)
    beta2 = jnp.asarray(beta).reshape(1, h)

    itemsize = jnp.dtype(x.dtype).itemsize
    sub = _sublane(itemsize)
    vmem_limit = _vmem_limit_bytes()

    if row_tile is None:
        tm = _choose_row_tile(rows, h, itemsize, vmem_limit)
    else:
        # Explicit override: clamp and keep sublane alignment for the dtype.
        tm = max(sub, (min(int(row_tile), max(rows, sub)) // sub) * sub)

    # No padding and no output slice: Pallas handles the partial last block
    # when rows % tm != 0 (OOB rows read garbage, compute on it per-row, and
    # their writes are dropped). This keeps HBM traffic at exactly one read
    # plus one write of the tensor for every shape.
    grid = (pl.cdiv(rows, tm),)

    # If a v7x profile shows the input DMA exposed at this tile size, add
    # pipeline_mode=pl.Buffered(3) on the x BlockSpec and shrink tm by ~1/3.
    out2 = pl.pallas_call(
        functools.partial(_layernorm_kernel, eps=float(eps),
                          inv_nm1=1.0 / float(h - 1)),
        out_shape=jax.ShapeDtypeStruct((rows, h), x.dtype),
        grid_spec=pltpu.PrefetchScalarGridSpec(
            num_scalar_prefetch=0,
            grid=grid,
            in_specs=[
                pl.BlockSpec((tm, h), lambda i: (i, 0)),   # x rows tile
                pl.BlockSpec((1, h), lambda i: (0, 0)),    # alpha (broadcast)
                pl.BlockSpec((1, h), lambda i: (0, 0)),    # beta  (broadcast)
            ],
            out_specs=pl.BlockSpec((tm, h), lambda i: (i, 0)),
        ),
        compiler_params=pltpu.CompilerParams(
            dimension_semantics=("parallel",),
            vmem_limit_bytes=vmem_limit,
        ),
    )(x2, alpha2, beta2)

    return out2.reshape(b, l, h)


def layernorm_ref(x, alpha, beta, eps=1e-4):
    mu = jnp.mean(x, axis=2, keepdims=True)
    sigma = jnp.std(x, axis=2, keepdims=True, ddof=1)  # unbiased, like torch.std
    return (x - mu) / (sigma + eps) * alpha + beta


if __name__ == "__main__":
    key = jax.random.PRNGKey(0)

    # Deterministic parameter init, matching nn.Parameter(torch.ones/zeros(1,1,H)).
    B, L, H = 2, 8, 32
    x = jax.random.normal(key, (B, L, H), dtype=jnp.float32)
    alpha = jnp.ones((1, 1, H), dtype=jnp.float32)
    beta = jnp.zeros((1, 1, H), dtype=jnp.float32)

    out = jax.block_until_ready(layernorm(x, alpha, beta, eps=1e-4))
    ref = layernorm_ref(x, alpha, beta, eps=1e-4)
    assert out.shape == (B, L, H)
    assert jnp.allclose(out, ref, atol=1e-5, rtol=1e-5), "mismatch vs reference"

    # Awkward row count (B*L not a multiple of the tile) exercises the Pallas
    # partial-last-block path (no pad / no slice, writes of OOB rows dropped).
    B2, L2 = 3, 5
    x2 = jax.random.normal(jax.random.PRNGKey(1), (B2, L2, H), dtype=jnp.float32)
    out2 = jax.block_until_ready(layernorm(x2, alpha, beta, eps=1e-4))
    ref2 = layernorm_ref(x2, alpha, beta, eps=1e-4)
    assert out2.shape == (B2, L2, H)
    assert jnp.allclose(out2, ref2, atol=1e-5, rtol=1e-5), "mismatch (ragged path)"

    print("KERNEL_OK")
</pallas_src>

<mosaic_0001>
module attributes {stable_mosaic.version = 11 : i64} {
  func.func @_layernorm_kernel(%arg0: i32, %arg1: memref<16x32xf32, #tpu.memory_space<vmem>>, %arg2: memref<1x32xf32, #tpu.memory_space<vmem>>, %arg3: memref<1x32xf32, #tpu.memory_space<vmem>>, %arg4: memref<16x32xf32, #tpu.memory_space<vmem>>) attributes {dimension_semantics = [#tpu.dimension_semantics<parallel>], iteration_bounds = array<i64: 1>, scalar_prefetch = 0 : i64, scratch_operands = 0 : i64, tpu.core_type = #tpu.core_type<tc>, window_params = [{transform_indices = @transform_0, window_bounds = array<i64: 16, 32>}, {pipeline_mode = #tpu.pipeline_mode<synchronous>, transform_indices = @transform_1, window_bounds = array<i64: 1, 32>}, {pipeline_mode = #tpu.pipeline_mode<synchronous>, transform_indices = @transform_2, window_bounds = array<i64: 1, 32>}, {transform_indices = @transform_3, window_bounds = array<i64: 16, 32>}]} {
    %c0 = arith.constant 0 : index
    %c0_0 = arith.constant 0 : index
    %0 = vector.load %arg1[%c0, %c0_0] : memref<16x32xf32, #tpu.memory_space<vmem>>, vector<16x32xf32>
    %cst = arith.constant dense<0.000000e+00> : vector<16xf32>
    %1 = vector.multi_reduction <add>, %0, %cst [1] : vector<16x32xf32> to vector<16xf32>
    %2 = vector.shape_cast %1 : vector<16xf32> to vector<16x1xf32>
    %cst_1 = arith.constant 3.200000e+01 : f32
    %3 = vector.broadcast %cst_1 : f32 to vector<16x1xf32>
    %4 = arith.divf %2, %3 : vector<16x1xf32>
    %5 = vector.broadcast %4 : vector<16x1xf32> to vector<16x32xf32>
    %6 = arith.subf %0, %5 : vector<16x32xf32>
    %7 = arith.mulf %6, %6 : vector<16x32xf32>
    %cst_2 = arith.constant dense<0.000000e+00> : vector<16xf32>
    %8 = vector.multi_reduction <add>, %7, %cst_2 [1] : vector<16x32xf32> to vector<16xf32>
    %9 = vector.shape_cast %8 : vector<16xf32> to vector<16x1xf32>
    %cst_3 = arith.constant 0.0322580636 : f32
    %10 = vector.broadcast %cst_3 : f32 to vector<16x1xf32>
    %11 = arith.mulf %9, %10 : vector<16x1xf32>
    %12 = math.sqrt %11 : vector<16x1xf32>
    %cst_4 = arith.constant 9.99999974E-5 : f32
    %13 = vector.broadcast %cst_4 : f32 to vector<16x1xf32>
    %14 = arith.addf %12, %13 : vector<16x1xf32>
    %15 = tpu.reciprocal %14 : vector<16x1xf32> -> vector<16x1xf32>
    %c0_5 = arith.constant 0 : index
    %c0_6 = arith.constant 0 : index
    %16 = vector.load %arg2[%c0_5, %c0_6] : memref<1x32xf32, #tpu.memory_space<vmem>>, vector<1x32xf32>
    %c0_7 = arith.constant 0 : index
    %c0_8 = arith.constant 0 : index
    %17 = vector.load %arg3[%c0_7, %c0_8] : memref<1x32xf32, #tpu.memory_space<vmem>>, vector<1x32xf32>
    %18 = vector.broadcast %15 : vector<16x1xf32> to vector<16x32xf32>
    %19 = arith.mulf %6, %18 : vector<16x32xf32>
    %20 = vector.broadcast %16 : vector<1x32xf32> to vector<16x32xf32>
    %21 = arith.mulf %19, %20 : vector<16x32xf32>
    %22 = vector.broadcast %17 : vector<1x32xf32> to vector<16x32xf32>
    %23 = arith.addf %21, %22 : vector<16x32xf32>
    %c0_9 = arith.constant 0 : index
    %c0_10 = arith.constant 0 : index
    %24 = vector.load %arg4[%c0_9, %c0_10] : memref<16x32xf32, #tpu.memory_space<vmem>>, vector<16x32xf32>
    tpu.vector_store %arg4[%c0_9, %c0_10], %23 {strides = array<i32>} : memref<16x32xf32, #tpu.memory_space<vmem>>, vector<16x32xf32>,
    return
  }
  func.func @transform_0(%arg0: i32) -> (i32, i32) {
    %c0_i32 = arith.constant 0 : i32
    %c0_i32_0 = arith.constant 0 : i32
    return %arg0, %c0_i32 : i32, i32
  }
  func.func @transform_1(%arg0: i32) -> (i32, i32) {
    %c0_i32 = arith.constant 0 : i32
    %c0_i32_0 = arith.constant 0 : i32
    %c0_i32_1 = arith.constant 0 : i32
    return %c0_i32, %c0_i32_0 : i32, i32
  }
  func.func @transform_2(%arg0: i32) -> (i32, i32) {
    %c0_i32 = arith.constant 0 : i32
    %c0_i32_0 = arith.constant 0 : i32
    %c0_i32_1 = arith.constant 0 : i32
    return %c0_i32, %c0_i32_0 : i32, i32
  }
  func.func @transform_3(%arg0: i32) -> (i32, i32) {
    %c0_i32 = arith.constant 0 : i32
    %c0_i32_0 = arith.constant 0 : i32
    return %arg0, %c0_i32 : i32, i32
  }
}

</mosaic_0001>

<llo_original>
// kernel: tpu_custom_call.1
$region0: #{tpu_custom_call.1}
  #allocation0 [shape = 'u32[]', space=smem, size = 0x4, offset = 0x4, fixed_abs, tag = 'smem constant byte address 0x4 - core index']
  #allocation1 [shape = 'u32[72,128]{1,0:T(1,128)}', space=vmem, size = 0x9000, scoped, tag = 'internal scratch']
  %s0 = inlined_call_operand.hbm [shape: f32[16,32], index: 0, kind: input, shape index: {}]
  %s1 = inlined_call_operand.hbm [shape: f32[1,32], index: 1, kind: input, shape index: {}]
  %s2 = inlined_call_operand.vmem [shape: f32[1,32], index: 2, kind: input, shape index: {}]
  %s3 = inlined_call_operand.hbm [shape: f32[16,32], index: 3, kind: output, shape index: {}]
  %s4 = sld [smem:[#allocation0]]
  $region30: #{tpu_custom_call.1} parent=0
    _
  %s6 = ssub.s32 1, %s4
  %s7 = scalar_select 0, %s6, %s4
  $region1: #{tpu_custom_call.1} parent=0
    #allocation2 [shape = 'u8[8192]{0}', space=vmem, size = 0x2000, scoped, tag = 'input window, operand 0, single buffered']
    #allocation3 [shape = 's32[1]{0}', space=sflag, size = 0x4, scoped, tag = 'scoped memory for tpu_custom_call.1']
    #allocation4 [shape = 's32[1]{0}', space=sflag, size = 0x4, scoped, tag = 'scoped memory for tpu_custom_call.1']
    #allocation5 [shape = 'u8[512]{0}', space=vmem, size = 0x400, scoped, tag = 'input window, operand 1, single buffered']
    #allocation6 [shape = 's32[1]{0}', space=sflag, size = 0x4, scoped, tag = 'scoped memory for tpu_custom_call.1']
    #allocation7 [shape = 'u8[8192]{0}', space=vmem, size = 0x2000, scoped, tag = 'output window, operand 0, single buffered']
    %8 = vsyncpa [#allocation3], 0
    %9 = vsyncpa [#allocation6], 0
    %10 = vsyncpa [#allocation4], 0
    // Predicated region
    $region2: #{tpu_custom_call.1} parent=1 // pred_check
      _
    $region3: #{tpu_custom_call.1} parent=1 // pred_check_branch
      %12 = sbr.rel (0) target = $region5
    $region4: #{tpu_custom_call.1} parent=1 // pred_region
      %14 = vsyncadd [#allocation3], 0
      %s15 = sshll.u32 %s0, 4
      %s16 = int_to_ptr.hbm [resolvable:$true] %s15
      %s17 = sshll.u32 [#allocation2], 4
      %s18 = int_to_ptr.vmem [resolvable:$true] %s17
      %23 = dma.hbm_to_vmem [thread:$0]  %s16, 256, %s18, [#allocation3], 128, 128, 8
    $region5: #{tpu_custom_call.1} parent=1 // pred_fallthru
      _
    // Predicated region
    $region6: #{tpu_custom_call.1} parent=1 // pred_check
      _
    $region7: #{tpu_custom_call.1} parent=1 // pred_check_branch
      %25 = sbr.rel (0) target = $region9
    $region8: #{tpu_custom_call.1} parent=1 // pred_region
      %27 = vsyncadd [#allocation6], 0
      %s29 = sshll.u32 %s1, 4
      %s30 = int_to_ptr.hbm [resolvable:$true] %s29
      %s31 = sshll.u32 [#allocation5], 4
      %s32 = int_to_ptr.vmem [resolvable:$true] %s31
      %34 = dma.hbm_to_vmem [thread:$0]  %s30, 16, %s32, [#allocation6]
    $region9: #{tpu_custom_call.1} parent=1 // pred_fallthru
      _
    // Predicated region
    $region10: #{tpu_custom_call.1} parent=1 // pred_check
      _
    $region11: #{tpu_custom_call.1} parent=1 // pred_check_branch
      %36 = sbr.rel (0) target = $region13
    $region12: #{tpu_custom_call.1} parent=1 // pred_region
      _
    $region13: #{tpu_custom_call.1} parent=1 // pred_fallthru
      _
    // Predicated region
    $region14: #{tpu_custom_call.1} parent=1 // pred_check
      _
    $region15: #{tpu_custom_call.1} parent=1 // pred_check_branch
      %38 = sbr.rel (0) target = $region17
    $region16: #{tpu_custom_call.1} parent=1 // pred_region
      %40 = dma.done [#allocation3], 256
    $region17: #{tpu_custom_call.1} parent=1 // pred_fallthru
      _
    // Predicated region
    $region18: #{tpu_custom_call.1} parent=1 // pred_check
      _
    $region19: #{tpu_custom_call.1} parent=1 // pred_check_branch
      %42 = sbr.rel (0) target = $region21
    $region20: #{tpu_custom_call.1} parent=1 // pred_region
      %44 = dma.done [#allocation6], 16
    $region21: #{tpu_custom_call.1} parent=1 // pred_fallthru
      _
    %v45 = vld [vmem:[#allocation2] sm:$0xff]
    %v46 = vld [vmem:[#allocation2 + $0x8] sm:$0xff]
    %vm47 = vcmask 261120
    %v48 = vsel %vm47, %v45, 0.0
    %49 = vadd.xlane.f32.xlu0 %v48
    %v50 = vpop.xlane.xlu0 %49
    %v51 = vsel %vm47, %v46, 0.0
    %52 = vadd.xlane.f32.xlu0 %v51
    %v53 = vpop.xlane.xlu0 %52
    %v54 = vrcp.pop 32.0
    %v55 = vmul.f32 32.0, %v54
    %v56 = vsub.f32 1.0, %v55
    %v57 = vmul.f32 %v54, %v56
    %v58 = vadd.f32 %v54, %v57
    %vm59 = vweird.f32 %v54
    %v60 = vsel %vm59, %v54, %v58
    %v61 = vmul.f32 %v50, %v60
    %v62 = vmul.f32 %v53, %v60
    %v63 = vsub.f32 %v45, %v61
    %v64 = vsub.f32 %v46, %v62
    %v65 = vmul.f32 %v63, %v63
    %v66 = vmul.f32 %v64, %v64
    %v67 = vsel %vm47, %v65, 0.0
    %68 = vadd.xlane.f32.xlu0 %v67
    %v69 = vpop.xlane.xlu0 %68
    %v70 = vsel %vm47, %v66, 0.0
    %71 = vadd.xlane.f32.xlu0 %v70
    %v72 = vpop.xlane.xlu0 %71
    %v73 = vmul.f32 %v69, 0.032258064
    %v74 = vmul.f32 %v72, 0.032258064
    %v75 = vrsqrt.pop %v73
    %v76 = vmul.f32 %v75, %v73
    %v77 = vmul.f32 %v76, %v75
    %v78 = vmul.f32 0.5, %v77
    %v79 = vsub.f32 1.5, %v78
    %v80 = vmul.f32 %v75, %v79
    %v81 = vmul.f32 %v73, %v80
    %vm82 = vcmp.eq.f32.partialorder %v73, inf
    %v83 = vsel %vm82, %v73, %v81
    %vm84 = vcmp.eq.f32.partialorder %v73, 0.0
    %v85 = vand.u32 %v73, 2147483648
    %v86 = vsel %vm84, %v85, %v83
    %v87 = vrsqrt.pop %v74
    %v88 = vmul.f32 %v87, %v74
    %v89 = vmul.f32 %v88, %v87
    %v90 = vmul.f32 0.5, %v89
    %v91 = vsub.f32 1.5, %v90
    %v92 = vmul.f32 %v87, %v91
    %v93 = vmul.f32 %v74, %v92
    %vm94 = vcmp.eq.f32.partialorder %v74, inf
    %v95 = vsel %vm94, %v74, %v93
    %vm96 = vcmp.eq.f32.partialorder %v74, 0.0
    %v97 = vand.u32 %v74, 2147483648
    %v98 = vsel %vm96, %v97, %v95
    %v99 = vadd.f32 %v86, 0.0001
    %v100 = vadd.f32 %v98, 0.0001
    %v101 = vrcp.pop %v99
    %v102 = vmul.f32 %v99, %v101
    %v103 = vsub.f32 1.0, %v102
    %v104 = vmul.f32 %v101, %v103
    %v105 = vadd.f32 %v101, %v104
    %vm106 = vweird.f32 %v99
    %vm107 = vweird.f32 %v101
    %vm108 = vmor %vm106, %vm107
    %v109 = vsel %vm108, %v101, %v105
    %v110 = vand.u32 2147483647, %v99
    %vm111 = vcmp.eq.f32.partialorder %v110, 8.507059e+37
    %v112 = vand.u32 %v99, 2147483648
    %v113 = vor.u32 1.1754944e-38, %v112
    %v114 = vsel %vm111, %v113, %v109
    %v115 = vrcp.pop %v100
    %v116 = vmul.f32 %v100, %v115
    %v117 = vsub.f32 1.0, %v116
    %v118 = vmul.f32 %v115, %v117
    %v119 = vadd.f32 %v115, %v118
    %vm120 = vweird.f32 %v100
    %vm121 = vweird.f32 %v115
    %vm122 = vmor %vm120, %vm121
    %v123 = vsel %vm122, %v115, %v119
    %v124 = vand.u32 2147483647, %v100
    %vm125 = vcmp.eq.f32.partialorder %v124, 8.507059e+37
    %v126 = vand.u32 %v100, 2147483648
    %v127 = vor.u32 1.1754944e-38, %v126
    %v128 = vsel %vm125, %v127, %v123
    %v129 = vld [vmem:[#allocation5] sm:$0x1]
    %v130 = vld [vmem:[%s2] sm:$0x1]
    %v131 = vmul.f32 %v63, %v114
    %v132 = vmul.f32 %v64, %v128
    %v134 = vperm.slane %v129, 0
    %v136 = vmul.f32 %v131, %v134
    %v137 = vmul.f32 %v132, %v134
    %v139 = vperm.slane %v130, 0
    %v141 = vadd.f32 %v136, %v139
    %v142 = vadd.f32 %v137, %v139
    %143 = vst.msk [vmem:[#allocation7] sm:$0xff] %vm47, %v141
    %144 = vst.msk [vmem:[#allocation7 + $0x8] sm:$0xff] %vm47, %v142
    // Predicated region
    $region22: #{tpu_custom_call.1} parent=1 // pred_check
      _
    $region23: #{tpu_custom_call.1} parent=1 // pred_check_branch
      %146 = sbr.rel (0) target = $region25
    $region24: #{tpu_custom_call.1} parent=1 // pred_region
      %148 = vsyncadd [#allocation4], 0
      %s149 = sshll.u32 [#allocation7], 4
      %s150 = int_to_ptr.vmem [resolvable:$true] %s149
      %s151 = sshll.u32 %s3, 4
      %s152 = int_to_ptr.hbm [resolvable:$true] %s151
      %157 = dma.vmem_to_hbm [thread:$0]  %s150, 256, %s152, [#allocation4], 128, 128, 8
    $region25: #{tpu_custom_call.1} parent=1 // pred_fallthru
      _
    // Predicated region
    $region26: #{tpu_custom_call.1} parent=1 // pred_check
      _
    $region27: #{tpu_custom_call.1} parent=1 // pred_check_branch
      %159 = sbr.rel (0) target = $region29
    $region28: #{tpu_custom_call.1} parent=1 // pred_region
      %161 = dma.done [#allocation4], 256
    $region29: #{tpu_custom_call.1} parent=1 // pred_fallthru
      _
    %162 = vsyncpa [#allocation3], 1
    %163 = vsyncpa [#allocation6], 1
    %164 = vsyncpa [#allocation4], 1

</llo_original>
